<compile_context>
chip_gen: v6e
topology: v6e:2x2x1
jax: 0.10.0
libtpu: 0.0.40
codegen_flags: <defaults>
</compile_context>

<pallas_src>
import functools

import jax
import jax.numpy as jnp
import numpy as np
from jax.experimental import pallas as pl
from jax.experimental.pallas import tpu as pltpu


def _ru(n, m):
    return ((n + m - 1) // m) * m


def _pick_tile_hw(hw, cap=1024):
    """Lane-dim tile: a divisor of hw that is a multiple of 128 and <= cap,
    else hw itself (a full-extent block is always legal).
    NOTE: the fallback (tile == hw) can exceed `cap` for awkward hw values
    (e.g. 13*13 = 169); this silently changes the VMEM footprint there."""
    if hw <= cap:
        return hw
    t = (cap // 128) * 128
    while t >= 128:
        if hw % t == 0:
            return t
        t -= 128
    return hw


def _sigmoid(x, approx):
    # exp runs on the EUP; approx=True additionally uses the EUP reciprocal
    # (nearly free next to VPU work).  approx=False (training bbox path) is
    # bit-closer to jax.nn.sigmoid.
    e = jnp.exp(-x)
    if approx:
        return pl.reciprocal(1.0 + e, approx=True)
    return 1.0 / (1.0 + e)


# ----------------------------------------------------------------------------
# Pallas kernel: 1x1 conv (matmul) + vectorized YOLO decode.
#   x_ref   : (1, C, T)      feature-map tile, native layout / dtype
#   w_ref   : (Npad, C)      permuted, group-aligned conv weight (matmul dtype)
#   b_ref   : (Npad, 1)      permuted conv bias (f32)
#   anc_ref : (S_box, 1)     0.5 * anchors arranged [w(A)|h(A)|w(A)|h(A)|pad]
#   outputs : lane-dense (rows, T) slabs, HW on the lane axis
# ----------------------------------------------------------------------------
def _yolo_head_kernel(x_ref, w_ref, b_ref, anc_ref, *out_refs, num_anchors,
                      num_class, stride, width, tile_hw, s_box, training,
                      matmul_dtype, score_dtype, approx):
    A = num_anchors
    nc = num_class
    T = tile_hw

    x = x_ref[0].astype(matmul_dtype)                       # (C, T)
    pred = jnp.dot(w_ref[...], x, preferred_element_type=jnp.float32)
    pred = pred + b_ref[...]                                # (Npad, T) f32

    # --- grid-cell offsets from the flattened spatial index (no HBM input) ---
    hw0 = (pl.program_id(0) * T).astype(jnp.float32)
    lane = jax.lax.broadcasted_iota(jnp.int32, (1, T), 1).astype(jnp.float32)
    idx = lane + hw0                                        # hw = y * W + x
    off_y = jnp.floor((idx + 0.5) / float(width))           # exact for fmap sizes
    off_x = idx - off_y * float(width)

    r = jax.lax.broadcasted_iota(jnp.int32, (s_box, 1), 0)  # row id in bbox group
    is_x = (r < A) | ((r >= 2 * A) & (r < 3 * A))           # rows [cx|cy|cx|cy]
    off = jnp.where(is_x, off_x, off_y)                     # (s_box, T)
    sign = jnp.where(r < 2 * A, -1.0, 1.0)                  # -wh (x0,y0) / +wh (x1,y1)

    ctr = pred[0:s_box, :]                                  # [cx|cy|cx|cy] rows
    scl = pred[s_box:2 * s_box, :]                          # [sw|sh|sw|sh] rows
    box_c = (_sigmoid(ctr, approx) + off) * float(stride)
    wh = jnp.exp(scl) * anc_ref[...]                        # anchors pre-halved
    bbox = box_c + sign * wh                                # rows [x0|y0|x1|y1]

    oc0 = 2 * s_box
    if training:
        bbox_ref, rawc_ref, raws_ref, obj_ref, cls_ref = out_refs
        bbox_ref[0] = bbox[0:4 * A, :]
        rawc_ref[0] = ctr[0:2 * A, :]                       # raw [cx|cy]
        raws_ref[0] = scl[0:2 * A, :]                       # raw [sw|sh]
        obj_ref[0] = pred[oc0:oc0 + A, :]                   # raw objness
        cls_ref[0] = pred[oc0 + 8:oc0 + 8 + nc * A, :]      # raw class logits
    else:
        bbox_ref, score_ref = out_refs
        bbox_ref[0] = bbox[0:4 * A, :]
        conf = _sigmoid(pred[oc0:oc0 + A, :], approx)       # (A, T), computed once
        cls_sig = _sigmoid(pred[oc0 + 8:oc0 + 8 + nc * A, :], approx)
        conf_rep = jnp.broadcast_to(conf[None, :, :], (nc, A, T)).reshape(nc * A, T)
        score_ref[0] = (cls_sig * conf_rep).astype(score_dtype)


# ----------------------------------------------------------------------------
# Wrapper: weight permutation, pallas_call, PyTorch-convention output assembly
# ----------------------------------------------------------------------------
def yolo_output_v3(x_nchw, weight, bias, anchors, stride, training=False,
                   matmul_dtype=None, score_dtype=jnp.float32,
                   tile_hw_cap=1024, fuse_detections=True):
    """x_nchw: (B, C, H, W) (any float dtype — pass bf16 if the producer can).
    weight: (A*P, C, 1, 1).  bias: (A*P,).  anchors: (A, 2).  stride: int."""
    B, C, H, W = x_nchw.shape
    A = int(anchors.shape[0])
    all_pred = int(weight.shape[0])
    P = all_pred // A
    nc = P - 5
    HW = H * W
    f32 = jnp.float32
    if matmul_dtype is None:
        matmul_dtype = jnp.float32 if training else jnp.bfloat16

    # Native layout: (B, C, H, W) -> (B, C, HW) is a free trailing-dim collapse;
    # no transpose / cast pass through HBM (the cast happens in-kernel).
    x_flat = x_nchw.reshape(B, C, HW)

    # Weight rows, grouped and 8-sublane-aligned:
    #   [0, s_box)          : [cx(A) cy(A) cx(A) cy(A)]  (centers, duplicated)
    #   [s_box, 2*s_box)    : [sw(A) sh(A) sw(A) sh(A)]  (scales,  duplicated)
    #   [2*s_box, +8)       : [obj(A)]
    #   [2*s_box+8, +nc*A)  : [cls0(A) cls1(A) ...]
    s_box = _ru(4 * A, 8)
    n_cls = nc * A
    n_pad = 2 * s_box + 8 + _ru(n_cls, 8)

    def ch(a, p):  # conv output-channel index in the original layout
        return a * P + p

    rows_ctr = [ch(a, t % 2) for t in range(4) for a in range(A)]
    rows_scl = [ch(a, 2 + t % 2) for t in range(4) for a in range(A)]
    rows_obj = [ch(a, 4) for a in range(A)]
    rows_cls = [ch(a, 5 + k) for k in range(nc) for a in range(A)]

    w2 = weight.reshape(all_pred, C).astype(f32)
    b1 = bias.reshape(all_pred).astype(f32)
    w_mat = jnp.zeros((n_pad, C), f32)
    b_col = jnp.zeros((n_pad, 1), f32)

    def fill(mat, col, start, rows):
        rows = np.asarray(rows, np.int32)
        mat = mat.at[start:start + len(rows), :].set(w2[rows])
        col = col.at[start:start + len(rows), 0].set(b1[rows])
        return mat, col

    w_mat, b_col = fill(w_mat, b_col, 0, rows_ctr)
    w_mat, b_col = fill(w_mat, b_col, s_box, rows_scl)
    w_mat, b_col = fill(w_mat, b_col, 2 * s_box, rows_obj)
    w_mat, b_col = fill(w_mat, b_col, 2 * s_box + 8, rows_cls)
    w_mat = w_mat.astype(matmul_dtype)

    anchors_j = jnp.asarray(anchors, f32)
    half = 0.5 * jnp.concatenate([anchors_j[:, 0], anchors_j[:, 1],
                                  anchors_j[:, 0], anchors_j[:, 1]])
    anc_col = jnp.zeros((s_box, 1), f32).at[:4 * A, 0].set(half)

    tile_hw = _pick_tile_hw(HW, tile_hw_cap)
    n_tiles = HW // tile_hw
    # HW tiles first so the megacore-sharded parallel axis is >1 even at B=1.
    grid = (n_tiles, B)

    kernel = functools.partial(
        _yolo_head_kernel, num_anchors=A, num_class=nc, stride=stride,
        width=W, tile_hw=tile_hw, s_box=s_box, training=training,
        matmul_dtype=matmul_dtype, score_dtype=score_dtype,
        approx=not training)

    in_specs = [
        pl.BlockSpec((1, C, tile_hw), lambda t, b: (b, 0, t)),
        pl.BlockSpec((n_pad, C), lambda t, b: (0, 0)),
        pl.BlockSpec((n_pad, 1), lambda t, b: (0, 0)),
        pl.BlockSpec((s_box, 1), lambda t, b: (0, 0)),
    ]

    def out_spec(rows):
        return pl.BlockSpec((1, rows, tile_hw), lambda t, b: (b, 0, t))

    if training:
        out_shape = (
            jax.ShapeDtypeStruct((B, 4 * A, HW), f32),   # bbox [x0|y0|x1|y1]
            jax.ShapeDtypeStruct((B, 2 * A, HW), f32),   # raw centers [cx|cy]
            jax.ShapeDtypeStruct((B, 2 * A, HW), f32),   # raw scales  [sw|sh]
            jax.ShapeDtypeStruct((B, A, HW), f32),       # objness
            jax.ShapeDtypeStruct((B, n_cls, HW), f32),   # class logits
        )
        out_specs = [out_spec(4 * A), out_spec(2 * A), out_spec(2 * A),
                     out_spec(A), out_spec(n_cls)]
        out_rows = 4 * A + 2 * A + 2 * A + A + n_cls
    else:
        out_shape = (
            jax.ShapeDtypeStruct((B, 4 * A, HW), f32),
            jax.ShapeDtypeStruct((B, n_cls, HW), score_dtype),
        )
        out_specs = [out_spec(4 * A), out_spec(n_cls)]
        out_rows = 4 * A + n_cls

    cost = pl.CostEstimate(
        flops=int(2 * B * HW * C * n_pad),
        transcendentals=int(B * HW * (8 * A + (1 + nc) * A)),
        bytes_accessed=int(x_flat.size * x_flat.dtype.itemsize
                           + w_mat.size * w_mat.dtype.itemsize
                           + n_pad * 4 + s_box * 4
                           + B * HW * out_rows * 4))

    outs = pl.pallas_call(
        kernel,
        out_shape=out_shape,
        grid_spec=pltpu.PrefetchScalarGridSpec(
            num_scalar_prefetch=0, grid=grid,
            in_specs=in_specs, out_specs=out_specs),
        compiler_params=pltpu.CompilerParams(
            dimension_semantics=("parallel", "parallel"),
            vmem_limit_bytes=48 * 1024 * 1024),
        cost_estimate=cost,
    )(x_flat, w_mat, b_col, anc_col)

    def to_hw_last(slab, types):
        # (B, types*A, HW), type-major/anchor-minor rows -> (B, HW, A, types)
        return jnp.transpose(slab.reshape(B, types, A, HW), (0, 3, 2, 1))

    if training:
        bbox_s, rawc_s, raws_s, obj_s, cls_s = outs
        bbox = to_hw_last(bbox_s, 4)                        # (B, HW, A, 4)
        raw_c = to_hw_last(rawc_s, 2)
        raw_s = to_hw_last(raws_s, 2)
        objness = to_hw_last(obj_s, 1)
        class_pred = to_hw_last(cls_s, nc)
        return (bbox.reshape(B, -1, 4), raw_c, raw_s, objness, class_pred)

    bbox_s, score_s = outs
    bbox = to_hw_last(bbox_s, 4)                            # (B, HW, A, 4) f32
    scores = jnp.transpose(score_s.reshape(B, nc, A, HW), (0, 1, 3, 2))
    if not fuse_detections:
        # Production path: keep (bbox, class_score) separate until NMS.
        return bbox, scores
    scores = scores.astype(f32)[..., None]                  # (B, nc, HW, A, 1)
    ids = jnp.broadcast_to(
        jnp.arange(nc, dtype=f32).reshape(1, nc, 1, 1, 1), scores.shape)
    bboxes = jnp.broadcast_to(bbox[:, None], (B, nc, HW, A, 4))
    # TODO(synk): the num_class-fold bbox broadcast is mandated by the module's
    # (B, num_class*HW*A, 6) detection format and dominates HBM bytes at COCO
    # scale; use fuse_detections=False to skip it in a real pipeline.
    det = jnp.concatenate([ids, scores, bboxes], axis=-1).reshape(B, -1, 6)
    return det


# ----------------------------------------------------------------------------
# Pure-JAX reference (mirrors the PyTorch forward) for correctness checking
# ----------------------------------------------------------------------------
def yolo_output_v3_ref(x_nchw, weight, bias, anchors, stride, training=False):
    B, C, H, W = x_nchw.shape
    A = anchors.shape[0]
    all_pred = weight.shape[0]
    P = all_pred // A
    num_class = P - 5
    HW = H * W
    f32 = jnp.float32

    w2 = weight.reshape(all_pred, C).astype(f32)
    pred = jnp.einsum('bchw,oc->bohw', x_nchw.astype(f32), w2,
                      precision=jax.lax.Precision.HIGHEST)
    pred = pred + bias.reshape(1, all_pred, 1, 1)
    pred = pred.reshape(B, all_pred, HW)
    pred = jnp.transpose(pred, (0, 2, 1)).reshape(B, HW, A, P)

    raw_c = pred[..., 0:2]
    raw_s = pred[..., 2:4]
    objness = pred[..., 4:5]
    class_pred = pred[..., 5:5 + num_class]

    gx, gy = jnp.meshgrid(jnp.arange(W, dtype=f32), jnp.arange(H, dtype=f32))
    offsets = jnp.stack([gx, gy], axis=-1).reshape(1, HW, 1, 2)

    box_c = (jax.nn.sigmoid(raw_c) + offsets) * float(stride)
    box_s = jnp.exp(raw_s) * anchors.reshape(1, 1, A, 2).astype(f32)
    conf = jax.nn.sigmoid(objness)
    class_score = jax.nn.sigmoid(class_pred) * conf
    wh = box_s / 2.0
    bbox = jnp.concatenate([box_c - wh, box_c + wh], axis=-1)

    if training:
        return (bbox.reshape(B, -1, 4), raw_c, raw_s, objness, class_pred)

    scores = jnp.transpose(class_score, (3, 0, 1, 2))[..., None]
    ids = jnp.broadcast_to(
        jnp.arange(num_class, dtype=f32).reshape(num_class, 1, 1, 1, 1),
        scores.shape)
    bboxes = jnp.broadcast_to(bbox[None], (num_class, B, HW, A, 4))
    det = jnp.concatenate([ids, scores, bboxes], axis=-1)
    det = jnp.transpose(det, (1, 0, 2, 3, 4)).reshape(B, -1, 6)
    return det


if __name__ == "__main__":
    # small deterministic config
    B, C_in, H, W = 2, 8, 16, 16
    num_class = 6
    stride = 32
    anchors = jnp.asarray(np.array([[116., 90.], [156., 198.], [373., 326.]],
                                   dtype=np.float32))           # (A=3, 2)
    A = anchors.shape[0]
    num_pred = 1 + 4 + num_class
    all_pred = A * num_pred

    key = jax.random.PRNGKey(0)
    kx, kw, kb, kx2 = jax.random.split(key, 4)
    x = jax.random.normal(kx, (B, C_in, H, W), dtype=jnp.float32)
    weight = 0.05 * jax.random.normal(kw, (all_pred, C_in, 1, 1), dtype=jnp.float32)
    bias = 0.05 * jax.random.normal(kb, (all_pred,), dtype=jnp.float32)

    det_ref = yolo_output_v3_ref(x, weight, bias, anchors, stride, training=False)

    # inference, f32 matmul: tight check against the f32 reference
    det_f32 = yolo_output_v3(x, weight, bias, anchors, stride,
                             training=False, matmul_dtype=jnp.float32)
    det_f32 = jax.block_until_ready(det_f32)
    assert det_f32.shape == (B, num_class * H * W * A, 6), det_f32.shape
    np.testing.assert_allclose(np.asarray(det_f32), np.asarray(det_ref),
                               rtol=5e-3, atol=1e-1)

    # inference, bf16 matmul (default perf config): looser tolerance
    det_bf16 = yolo_output_v3(x, weight, bias, anchors, stride, training=False)
    det_bf16 = jax.block_until_ready(det_bf16)
    np.testing.assert_allclose(np.asarray(det_bf16), np.asarray(det_ref),
                               rtol=2e-2, atol=5e-1)

    # inference, bf16 class-score writeback (v5e bandwidth option)
    det_bf16s = yolo_output_v3(x, weight, bias, anchors, stride, training=False,
                               matmul_dtype=jnp.float32,
                               score_dtype=jnp.bfloat16)
    det_bf16s = jax.block_until_ready(det_bf16s)
    np.testing.assert_allclose(np.asarray(det_bf16s), np.asarray(det_ref),
                               rtol=2e-2, atol=1e-1)

    # multi-tile grid (HW split across lane tiles), B=1 inference
    x2 = jax.random.normal(kx2, (1, C_in, 32, 32), dtype=jnp.float32)
    det2_ref = yolo_output_v3_ref(x2, weight, bias, anchors, stride, training=False)
    det2 = yolo_output_v3(x2, weight, bias, anchors, stride, training=False,
                          matmul_dtype=jnp.float32, tile_hw_cap=512)
    det2 = jax.block_until_ready(det2)
    np.testing.assert_allclose(np.asarray(det2), np.asarray(det2_ref),
                               rtol=5e-3, atol=1e-1)

    # training path (defaults to f32 matmul + exact sigmoid)
    tr = yolo_output_v3(x, weight, bias, anchors, stride, training=True)
    tr = jax.block_until_ready(tr)
    tr_ref = yolo_output_v3_ref(x, weight, bias, anchors, stride, training=True)
    np.testing.assert_allclose(np.asarray(tr[0]), np.asarray(tr_ref[0]),
                               rtol=5e-3, atol=1e-1)
    for a, b in zip(tr[1:], tr_ref[1:]):
        np.testing.assert_allclose(np.asarray(a), np.asarray(b),
                                   rtol=5e-3, atol=5e-3)

    print("KERNEL_OK")
</pallas_src>

<mosaic_0001>
module attributes {stable_mosaic.version = 11 : i64} {
  func.func @_yolo_head_kernel(%arg0: i32, %arg1: i32, %arg2: memref<1x8x256xf32, #tpu.memory_space<vmem>>, %arg3: memref<64x8xf32, #tpu.memory_space<vmem>>, %arg4: memref<64x1xf32, #tpu.memory_space<vmem>>, %arg5: memref<16x1xf32, #tpu.memory_space<vmem>>, %arg6: memref<1x12x256xf32, #tpu.memory_space<vmem>>, %arg7: memref<1x18x256xf32, #tpu.memory_space<vmem>>) attributes {dimension_semantics = [#tpu.dimension_semantics<parallel>, #tpu.dimension_semantics<parallel>], iteration_bounds = array<i64: 1, 2>, scalar_prefetch = 0 : i64, scratch_operands = 0 : i64, tpu.core_type = #tpu.core_type<tc>, window_params = [{transform_indices = @transform_0, window_bounds = array<i64: 1, 8, 256>}, {pipeline_mode = #tpu.pipeline_mode<synchronous>, transform_indices = @transform_1, window_bounds = array<i64: 64, 8>}, {pipeline_mode = #tpu.pipeline_mode<synchronous>, transform_indices = @transform_2, window_bounds = array<i64: 64, 1>}, {pipeline_mode = #tpu.pipeline_mode<synchronous>, transform_indices = @transform_3, window_bounds = array<i64: 16, 1>}, {transform_indices = @transform_4, window_bounds = array<i64: 1, 12, 256>}, {transform_indices = @transform_5, window_bounds = array<i64: 1, 18, 256>}]} {
    %c0 = arith.constant 0 : index
    %c0_0 = arith.constant 0 : index
    %c0_1 = arith.constant 0 : index
    %0 = vector.load %arg2[%c0, %c0_0, %c0_1] : memref<1x8x256xf32, #tpu.memory_space<vmem>>, vector<1x8x256xf32>
    %1 = vector.shape_cast %0 : vector<1x8x256xf32> to vector<8x256xf32>
    %c0_2 = arith.constant 0 : index
    %c0_3 = arith.constant 0 : index
    %2 = vector.load %arg3[%c0_2, %c0_3] : memref<64x8xf32, #tpu.memory_space<vmem>>, vector<64x8xf32>
    %cst = arith.constant dense<0.000000e+00> : vector<64x256xf32>
    %3 = tpu.matmul %2, %1, %cst {dimension_numbers = #tpu.dot_dimension_numbers<[1], [0], [0], [1], [0, 0, 1, 1], [], []>} : vector<64x8xf32>, vector<8x256xf32>, vector<64x256xf32> -> vector<64x256xf32>
    %c0_4 = arith.constant 0 : index
    %c0_5 = arith.constant 0 : index
    %4 = vector.load %arg4[%c0_4, %c0_5] : memref<64x1xf32, #tpu.memory_space<vmem>>, vector<64x1xf32>
    %5 = vector.broadcast %4 : vector<64x1xf32> to vector<64x256xf32>
    %6 = arith.addf %3, %5 : vector<64x256xf32>
    %c256_i32 = arith.constant 256 : i32
    %7 = arith.muli %arg0, %c256_i32 : i32
    %8 = arith.sitofp %7 : i32 to f32
    %9 = tpu.iota {dimensions = array<i32: 1>} : vector<1x256xi32>
    %10 = arith.sitofp %9 : vector<1x256xi32> to vector<1x256xf32>
    %11 = vector.broadcast %8 : f32 to vector<1x256xf32>
    %12 = arith.addf %10, %11 : vector<1x256xf32>
    %cst_6 = arith.constant 5.000000e-01 : f32
    %13 = vector.broadcast %cst_6 : f32 to vector<1x256xf32>
    %14 = arith.addf %12, %13 : vector<1x256xf32>
    %cst_7 = arith.constant 1.600000e+01 : f32
    %15 = vector.broadcast %cst_7 : f32 to vector<1x256xf32>
    %16 = arith.divf %14, %15 : vector<1x256xf32>
    %17 = math.floor %16 : vector<1x256xf32>
    %cst_8 = arith.constant 1.600000e+01 : f32
    %18 = vector.broadcast %cst_8 : f32 to vector<1x256xf32>
    %19 = arith.mulf %17, %18 : vector<1x256xf32>
    %20 = arith.subf %12, %19 : vector<1x256xf32>
    %21 = tpu.iota {dimensions = array<i32: 0>} : vector<16x1xi32>
    %c3_i32 = arith.constant 3 : i32
    %22 = vector.broadcast %c3_i32 : i32 to vector<16x1xi32>
    %23 = arith.cmpi slt, %21, %22 : vector<16x1xi32>
    %c6_i32 = arith.constant 6 : i32
    %24 = vector.broadcast %c6_i32 : i32 to vector<16x1xi32>
    %25 = arith.cmpi sge, %21, %24 : vector<16x1xi32>
    %c9_i32 = arith.constant 9 : i32
    %26 = vector.broadcast %c9_i32 : i32 to vector<16x1xi32>
    %27 = arith.cmpi slt, %21, %26 : vector<16x1xi32>
    %28 = arith.andi %25, %27 : vector<16x1xi1>
    %29 = arith.ori %23, %28 : vector<16x1xi1>
    %30 = vector.shape_cast %29 : vector<16x1xi1> to vector<16x1xi1>
    %31 = vector.broadcast %30 : vector<16x1xi1> to vector<16x256xi1>
    %32 = vector.shape_cast %20 : vector<1x256xf32> to vector<1x256xf32>
    %33 = vector.broadcast %32 : vector<1x256xf32> to vector<16x256xf32>
    %34 = vector.shape_cast %17 : vector<1x256xf32> to vector<1x256xf32>
    %35 = vector.broadcast %34 : vector<1x256xf32> to vector<16x256xf32>
    %36 = arith.select %31, %33, %35 : vector<16x256xi1>, vector<16x256xf32>
    %c6_i32_9 = arith.constant 6 : i32
    %37 = vector.broadcast %c6_i32_9 : i32 to vector<16x1xi32>
    %38 = arith.cmpi slt, %21, %37 : vector<16x1xi32>
    %cst_10 = arith.constant -1.000000e+00 : f32
    %cst_11 = arith.constant 1.000000e+00 : f32
    %39 = vector.broadcast %cst_10 : f32 to vector<16x1xf32>
    %40 = vector.broadcast %cst_11 : f32 to vector<16x1xf32>
    %41 = arith.select %38, %39, %40 : vector<16x1xi1>, vector<16x1xf32>
    %42 = vector.extract_strided_slice %6 {offsets = [0, 0], sizes = [16, 256], strides = [1, 1]} : vector<64x256xf32> to vector<16x256xf32>
    %43 = vector.extract_strided_slice %6 {offsets = [16, 0], sizes = [16, 256], strides = [1, 1]} : vector<64x256xf32> to vector<16x256xf32>
    %cst_12 = arith.constant 0.000000e+00 : f32
    %44 = vector.broadcast %cst_12 : f32 to vector<16x256xf32>
    %45 = arith.subf %44, %42 : vector<16x256xf32>
    %46 = math.exp %45 : vector<16x256xf32>
    %cst_13 = arith.constant 1.000000e+00 : f32
    %47 = vector.broadcast %cst_13 : f32 to vector<16x256xf32>
    %48 = arith.addf %47, %46 : vector<16x256xf32>
    %49 = tpu.reciprocal %48 {approx = true} : vector<16x256xf32> -> vector<16x256xf32>
    %50 = arith.addf %49, %36 : vector<16x256xf32>
    %cst_14 = arith.constant 3.200000e+01 : f32
    %51 = vector.broadcast %cst_14 : f32 to vector<16x256xf32>
    %52 = arith.mulf %50, %51 : vector<16x256xf32>
    %53 = math.exp %43 : vector<16x256xf32>
    %c0_15 = arith.constant 0 : index
    %c0_16 = arith.constant 0 : index
    %54 = vector.load %arg5[%c0_15, %c0_16] : memref<16x1xf32, #tpu.memory_space<vmem>>, vector<16x1xf32>
    %55 = vector.broadcast %54 : vector<16x1xf32> to vector<16x256xf32>
    %56 = arith.mulf %53, %55 : vector<16x256xf32>
    %57 = vector.broadcast %41 : vector<16x1xf32> to vector<16x256xf32>
    %58 = arith.mulf %57, %56 : vector<16x256xf32>
    %59 = arith.addf %52, %58 : vector<16x256xf32>
    %60 = vector.extract_strided_slice %59 {offsets = [0, 0], sizes = [12, 256], strides = [1, 1]} : vector<16x256xf32> to vector<12x256xf32>
    %c0_17 = arith.constant 0 : index
    %c0_18 = arith.constant 0 : index
    %c0_19 = arith.constant 0 : index
    %61 = vector.load %arg6[%c0_17, %c0_18, %c0_19] : memref<1x12x256xf32, #tpu.memory_space<vmem>>, vector<1x12x256xf32>
    %62 = vector.shape_cast %61 : vector<1x12x256xf32> to vector<12x256xf32>
    %63 = vector.shape_cast %60 : vector<12x256xf32> to vector<1x12x256xf32>
    tpu.vector_store %arg6[%c0_17, %c0_18, %c0_19], %63 {strides = array<i32>} : memref<1x12x256xf32, #tpu.memory_space<vmem>>, vector<1x12x256xf32>,
    %64 = vector.extract_strided_slice %6 {offsets = [32, 0], sizes = [3, 256], strides = [1, 1]} : vector<64x256xf32> to vector<3x256xf32>
    %cst_20 = arith.constant 0.000000e+00 : f32
    %65 = vector.broadcast %cst_20 : f32 to vector<3x256xf32>
    %66 = arith.subf %65, %64 : vector<3x256xf32>
    %67 = math.exp %66 : vector<3x256xf32>
    %cst_21 = arith.constant 1.000000e+00 : f32
    %68 = vector.broadcast %cst_21 : f32 to vector<3x256xf32>
    %69 = arith.addf %68, %67 : vector<3x256xf32>
    %70 = tpu.reciprocal %69 {approx = true} : vector<3x256xf32> -> vector<3x256xf32>
    %71 = vector.extract_strided_slice %6 {offsets = [40, 0], sizes = [18, 256], strides = [1, 1]} : vector<64x256xf32> to vector<18x256xf32>
    %cst_22 = arith.constant 0.000000e+00 : f32
    %72 = vector.broadcast %cst_22 : f32 to vector<18x256xf32>
    %73 = arith.subf %72, %71 : vector<18x256xf32>
    %74 = math.exp %73 : vector<18x256xf32>
    %cst_23 = arith.constant 1.000000e+00 : f32
    %75 = vector.broadcast %cst_23 : f32 to vector<18x256xf32>
    %76 = arith.addf %75, %74 : vector<18x256xf32>
    %77 = tpu.reciprocal %76 {approx = true} : vector<18x256xf32> -> vector<18x256xf32>
    %78 = vector.shape_cast %70 : vector<3x256xf32> to vector<1x3x256xf32>
    %79 = vector.shape_cast %78 : vector<1x3x256xf32> to vector<1x3x256xf32>
    %80 = vector.broadcast %79 : vector<1x3x256xf32> to vector<6x3x256xf32>
    %81 = vector.shape_cast %80 : vector<6x3x256xf32> to vector<18x256xf32>
    %82 = arith.mulf %77, %81 : vector<18x256xf32>
    %c0_24 = arith.constant 0 : index
    %c0_25 = arith.constant 0 : index
    %c0_26 = arith.constant 0 : index
    %83 = vector.load %arg7[%c0_24, %c0_25, %c0_26] : memref<1x18x256xf32, #tpu.memory_space<vmem>>, vector<1x18x256xf32>
    %84 = vector.shape_cast %83 : vector<1x18x256xf32> to vector<18x256xf32>
    %85 = vector.shape_cast %82 : vector<18x256xf32> to vector<1x18x256xf32>
    tpu.vector_store %arg7[%c0_24, %c0_25, %c0_26], %85 {strides = array<i32>} : memref<1x18x256xf32, #tpu.memory_space<vmem>>, vector<1x18x256xf32>,
    return
  }
  func.func @transform_0(%arg0: i32, %arg1: i32) -> (i32, i32, i32) {
    %c0_i32 = arith.constant 0 : i32
    %c0_i32_0 = arith.constant 0 : i32
    return %arg1, %c0_i32, %arg0 : i32, i32, i32
  }
  func.func @transform_1(%arg0: i32, %arg1: i32) -> (i32, i32) {
    %c0_i32 = arith.constant 0 : i32
    %c0_i32_0 = arith.constant 0 : i32
    %c0_i32_1 = arith.constant 0 : i32
    return %c0_i32, %c0_i32_0 : i32, i32
  }
  func.func @transform_2(%arg0: i32, %arg1: i32) -> (i32, i32) {
    %c0_i32 = arith.constant 0 : i32
    %c0_i32_0 = arith.constant 0 : i32
    %c0_i32_1 = arith.constant 0 : i32
    return %c0_i32, %c0_i32_0 : i32, i32
  }
  func.func @transform_3(%arg0: i32, %arg1: i32) -> (i32, i32) {
    %c0_i32 = arith.constant 0 : i32
    %c0_i32_0 = arith.constant 0 : i32
    %c0_i32_1 = arith.constant 0 : i32
    return %c0_i32, %c0_i32_0 : i32, i32
  }
  func.func @transform_4(%arg0: i32, %arg1: i32) -> (i32, i32, i32) {
    %c0_i32 = arith.constant 0 : i32
    %c0_i32_0 = arith.constant 0 : i32
    return %arg1, %c0_i32, %arg0 : i32, i32, i32
  }
  func.func @transform_5(%arg0: i32, %arg1: i32) -> (i32, i32, i32) {
    %c0_i32 = arith.constant 0 : i32
    %c0_i32_0 = arith.constant 0 : i32
    return %arg1, %c0_i32, %arg0 : i32, i32, i32
  }
}

</mosaic_0001>

<llo_original>
// kernel: tpu_custom_call.1
$region0: #{tpu_custom_call.1}
  #allocation0 [shape = 'u32[]', space=smem, size = 0x4, offset = 0x4, fixed_abs, tag = 'smem constant byte address 0x4 - core index']
  #allocation1 [shape = 'u32[144,128]{1,0:T(1,128)}', space=vmem, size = 0x12000, scoped, tag = 'internal scratch']
  %s0 = inlined_call_operand.vmem [shape: f32[2,8,256], index: 0, kind: input, shape index: {}]
  %s1 = inlined_call_operand.vmem [shape: f32[64,8], index: 1, kind: input, shape index: {}]
  %s2 = inlined_call_operand.vmem [shape: f32[64,1], index: 2, kind: input, shape index: {}]
  %s3 = inlined_call_operand.vmem [shape: f32[16,1], index: 3, kind: input, shape index: {}]
  %s4 = inlined_call_operand.vmem [shape: f32[2,12,256], index: 4, kind: output, shape index: {0}]
  %s5 = inlined_call_operand.vmem [shape: f32[2,18,256], index: 5, kind: output, shape index: {1}]
  %6 = xla_tuple %s4, %s5
  %s7 = sld [smem:[#allocation0]]
  $region57: #{tpu_custom_call.1} parent=0
    _
  %s9 = ssub.s32 1, %s7
  %s10 = scalar_select 0, %s9, %s7
  loop: start=0, step=1, limit=4
  $region2: #{tpu_custom_call.1} parent=0 // loop_pre_header
    _
  $region3: #{tpu_custom_call.1} parent=0 // loop_header
    %s12 = sphi 0, %s16
    %p13 = scmp.ge.s32.totalorder %s12, 4
    %s19 = sphi 0, %s31
    %s20 = sphi 0, %s27
    %s21 = sphi 0, %s19
    %s22 = sphi 0, %s20
    %s23 = sphi 0, %s21
    %s24 = sphi 0, %s22
    %s36 = sphi 0, %s38
    %s39 = sphi 0, %s36
    %s40 = sphi 0, %s39
    %s56 = sphi 0, %s40
    %s60 = sphi 0, %s60
    %s62 = sphi 0, %s60
    %s63 = sphi 0, %s62
    %s77 = sphi 0, %s63
    %s81 = sphi 0, %s81
    %s83 = sphi 0, %s81
    %s84 = sphi 0, %s83
    %s98 = sphi 0, %s84
    %s102 = sphi 0, %s102
    %s104 = sphi 0, %s102
    %s105 = sphi 0, %s104
    %s119 = sphi 0, %s105
    %s127 = sphi 0, %s129
    %s130 = sphi 0, %s127
    %s131 = sphi 0, %s130
    %s147 = sphi 0, %s131
    %s155 = sphi 0, %s157
    %s158 = sphi 0, %s155
    %s159 = sphi 0, %s158
    %s175 = sphi 0, %s159
  $region4: #{tpu_custom_call.1} parent=0 // loop_header_branch
    %15 = sbr.rel (%p13) target = $region8
  $region5: #{tpu_custom_call.1} parent=0 // loop_body
    %s17 = ssub.s32 %s12, 1
    %s18 = ssub.s32 %s12, 2
    %s25 = sadd.s32 1, %s20
    %p26 = scmp.ge.s32.totalorder %s25, 2
    %s27 = scalar_select %p26, 0, %s25
    %s28 = sadd.s32 1, %s19
    %s29 = scalar_select %p26, %s28, %s19
    %p30 = scmp.ge.s32.totalorder %s29, 1
    %s31 = scalar_select %p30, 0, %s29
    %s32 = ssub.s32 %s20, %s27
    %s33 = ssub.s32 %s19, %s31
    %s34 = sor.u32 %s32, %s33
    %p35 = scmp.eq.s32.totalorder %s34, 0
    %s37 = sadd.s32 %s36, 1
    %s38 = scalar_select %p35, %s36, %s37
    %p41 = pneg %p35
    %p42 = scmp.eq.s32.totalorder %s12, 1
    %p43 = por %p41, %p42
    %p44 = scmp.ne.s32.totalorder %s36, %s39
    %p45 = scmp.eq.s32.totalorder %s12, 0
    %p46 = por %p44, %p45
    %p47 = scmp.ne.s32.totalorder %s36, %s39
    %p48 = scmp.eq.s32.totalorder %s17, 1
    %p49 = por %p47, %p48
    %p50 = scmp.ne.s32.totalorder %s39, %s40
    %p51 = scmp.eq.s32.totalorder %s17, 0
    %p52 = por %p50, %p51
    %p53 = scmp.ne.s32.totalorder %s39, %s40
    %p54 = scmp.eq.s32.totalorder %s18, 1
    %p55 = por %p53, %p54
    %p57 = scmp.ne.s32.totalorder %s40, %s56
    %p58 = scmp.eq.s32.totalorder %s18, 0
    %p59 = por %p57, %p58
    %s61 = sadd.s32 %s60, 1
    %p64 = scmp.eq.s32.totalorder %s12, 1
    %p65 = scmp.ne.s32.totalorder %s60, %s62
    %p66 = scmp.eq.s32.totalorder %s12, 0
    %p67 = por %p65, %p66
    %p68 = scmp.ne.s32.totalorder %s60, %s62
    %p69 = scmp.eq.s32.totalorder %s17, 1
    %p70 = por %p68, %p69
    %p71 = scmp.ne.s32.totalorder %s62, %s63
    %p72 = scmp.eq.s32.totalorder %s17, 0
    %p73 = por %p71, %p72
    %p74 = scmp.ne.s32.totalorder %s62, %s63
    %p75 = scmp.eq.s32.totalorder %s18, 1
    %p76 = por %p74, %p75
    %p78 = scmp.ne.s32.totalorder %s63, %s77
    %p79 = scmp.eq.s32.totalorder %s18, 0
    %p80 = por %p78, %p79
    %s82 = sadd.s32 %s81, 1
    %p85 = scmp.eq.s32.totalorder %s12, 1
    %p86 = scmp.ne.s32.totalorder %s81, %s83
    %p87 = scmp.eq.s32.totalorder %s12, 0
    %p88 = por %p86, %p87
    %p89 = scmp.ne.s32.totalorder %s81, %s83
    %p90 = scmp.eq.s32.totalorder %s17, 1
    %p91 = por %p89, %p90
    %p92 = scmp.ne.s32.totalorder %s83, %s84
    %p93 = scmp.eq.s32.totalorder %s17, 0
    %p94 = por %p92, %p93
    %p95 = scmp.ne.s32.totalorder %s83, %s84
    %p96 = scmp.eq.s32.totalorder %s18, 1
    %p97 = por %p95, %p96
    %p99 = scmp.ne.s32.totalorder %s84, %s98
    %p100 = scmp.eq.s32.totalorder %s18, 0
    %p101 = por %p99, %p100
    %s103 = sadd.s32 %s102, 1
    %p106 = scmp.eq.s32.totalorder %s12, 1
    %p107 = scmp.ne.s32.totalorder %s102, %s104
    %p108 = scmp.eq.s32.totalorder %s12, 0
    %p109 = por %p107, %p108
    %p110 = scmp.ne.s32.totalorder %s102, %s104
    %p111 = scmp.eq.s32.totalorder %s17, 1
    %p112 = por %p110, %p111
    %p113 = scmp.ne.s32.totalorder %s104, %s105
    %p114 = scmp.eq.s32.totalorder %s17, 0
    %p115 = por %p113, %p114
    %p116 = scmp.ne.s32.totalorder %s104, %s105
    %p117 = scmp.eq.s32.totalorder %s18, 1
    %p118 = por %p116, %p117
    %p120 = scmp.ne.s32.totalorder %s105, %s119
    %p121 = scmp.eq.s32.totalorder %s18, 0
    %p122 = por %p120, %p121
    %s123 = ssub.s32 %s20, %s27
    %s124 = ssub.s32 %s19, %s31
    %s125 = sor.u32 %s123, %s124
    %p126 = scmp.eq.s32.totalorder %s125, 0
    %s128 = sadd.s32 %s127, 1
    %s129 = scalar_select %p126, %s127, %s128
    %p132 = pneg %p126
    %p133 = scmp.eq.s32.totalorder %s12, 1
    %p134 = por %p132, %p133
    %p135 = scmp.ne.s32.totalorder %s127, %s130
    %p136 = scmp.eq.s32.totalorder %s12, 0
    %p137 = por %p135, %p136
    %p138 = scmp.ne.s32.totalorder %s127, %s130
    %p139 = scmp.eq.s32.totalorder %s17, 1
    %p140 = por %p138, %p139
    %p141 = scmp.ne.s32.totalorder %s130, %s131
    %p142 = scmp.eq.s32.totalorder %s17, 0
    %p143 = por %p141, %p142
    %p144 = scmp.ne.s32.totalorder %s130, %s131
    %p145 = scmp.eq.s32.totalorder %s18, 1
    %p146 = por %p144, %p145
    %p148 = scmp.ne.s32.totalorder %s131, %s147
    %p149 = scmp.eq.s32.totalorder %s18, 0
    %p150 = por %p148, %p149
    %s151 = ssub.s32 %s20, %s27
    %s152 = ssub.s32 %s19, %s31
    %s153 = sor.u32 %s151, %s152
    %p154 = scmp.eq.s32.totalorder %s153, 0
    %s156 = sadd.s32 %s155, 1
    %s157 = scalar_select %p154, %s155, %s156
    %p160 = pneg %p154
    %p161 = scmp.eq.s32.totalorder %s12, 1
    %p162 = por %p160, %p161
    %p163 = scmp.ne.s32.totalorder %s155, %s158
    %p164 = scmp.eq.s32.totalorder %s12, 0
    %p165 = por %p163, %p164
    %p166 = scmp.ne.s32.totalorder %s155, %s158
    %p167 = scmp.eq.s32.totalorder %s17, 1
    %p168 = por %p166, %p167
    %p169 = scmp.ne.s32.totalorder %s158, %s159
    %p170 = scmp.eq.s32.totalorder %s17, 0
    %p171 = por %p169, %p170
    %p172 = scmp.ne.s32.totalorder %s158, %s159
    %p173 = scmp.eq.s32.totalorder %s18, 1
    %p174 = por %p172, %p173
    %p176 = scmp.ne.s32.totalorder %s159, %s175
    %p177 = scmp.eq.s32.totalorder %s18, 0
    %p178 = por %p176, %p177
    %p179 = scmp.le.s32.totalorder 1, %s12
    %p180 = scmp.lt.s32.totalorder %s12, 3
    %p181 = pnand %p179, %p180
    %p182 = pneg %p181
    // Predicated region
    $region9: #{tpu_custom_call.1} parent=5 // pred_check
      _
    $region10: #{tpu_custom_call.1} parent=5 // pred_check_branch
      %184 = sbr.rel (%p181) target = $region12
    $region11: #{tpu_custom_call.1} parent=5 // pred_region
      %s185 = ssub.s32 %s12, 1
      // Predicated region
      $region13: #{tpu_custom_call.1} parent=11 // pred_check
        %p186 = pneg %p73
      $region14: #{tpu_custom_call.1} parent=11 // pred_check_branch
        %188 = sbr.rel (%p186) target = $region16
      $region15: #{tpu_custom_call.1} parent=11 // pred_region
        _
      $region16: #{tpu_custom_call.1} parent=11 // pred_fallthru
        _
      // Predicated region
      $region17: #{tpu_custom_call.1} parent=11 // pred_check
        %p189 = pneg %p94
      $region18: #{tpu_custom_call.1} parent=11 // pred_check_branch
        %191 = sbr.rel (%p189) target = $region20
      $region19: #{tpu_custom_call.1} parent=11 // pred_region
        _
      $region20: #{tpu_custom_call.1} parent=11 // pred_fallthru
        _
      // Predicated region
      $region21: #{tpu_custom_call.1} parent=11 // pred_check
        %p192 = pneg %p115
      $region22: #{tpu_custom_call.1} parent=11 // pred_check_branch
        %194 = sbr.rel (%p192) target = $region24
      $region23: #{tpu_custom_call.1} parent=11 // pred_region
        _
      $region24: #{tpu_custom_call.1} parent=11 // pred_fallthru
        _
    $region12: #{tpu_custom_call.1} parent=5 // pred_fallthru
      _
    %p195 = scmp.lt.s32.totalorder %s12, 2
    // Predicated region
    $region25: #{tpu_custom_call.1} parent=5 // pred_check
      %p196 = pneg %p195
    $region26: #{tpu_custom_call.1} parent=5 // pred_check_branch
      %198 = sbr.rel (%p196) target = $region28
    $region27: #{tpu_custom_call.1} parent=5 // pred_region
      // Predicated region
      $region29: #{tpu_custom_call.1} parent=27 // pred_check
        %p199 = pneg %p46
      $region30: #{tpu_custom_call.1} parent=27 // pred_check_branch
        %201 = sbr.rel (%p199) target = $region32
      $region31: #{tpu_custom_call.1} parent=27 // pred_region
        %s202 = smul.u32 2, %s19
        %p203 = scmp.lt.s32.totalorder %s20, 1
        %s204 = scalar_select %p203, %s20, 1
        %p205 = scmp.lt.s32.totalorder %s202, 1
        %s206 = scalar_select %p205, %s202, 1
        %s207 = smul.addr %s204, 2
        %s208 = sadd.s32 %s206, %s207
        %s209 = smul.addr %s208, 8
        %s210 = scalar_lea.vmem %s0, %s209
        %s211 = smul.u32 2, %s19
      $region32: #{tpu_custom_call.1} parent=27 // pred_fallthru
        _
    $region28: #{tpu_custom_call.1} parent=5 // pred_fallthru
      _
    %p212 = scmp.le.s32.totalorder 1, %s12
    %p213 = scmp.lt.s32.totalorder %s12, 3
    %p214 = pnand %p212, %p213
    %p215 = pneg %p214
    // Predicated region
    $region33: #{tpu_custom_call.1} parent=5 // pred_check
      _
    $region34: #{tpu_custom_call.1} parent=5 // pred_check_branch
      %217 = sbr.rel (%p214) target = $region36
    $region35: #{tpu_custom_call.1} parent=5 // pred_region
      %s218 = ssub.s32 %s12, 1
      %s219 = smul.u32 2, %s21
      %p220 = scmp.lt.s32.totalorder %s22, 1
      %s221 = scalar_select %p220, %s22, 1
      %p222 = scmp.lt.s32.totalorder %s219, 1
      %s223 = scalar_select %p222, %s219, 1
      %s224 = smul.addr %s221, 2
      %s225 = sadd.s32 %s223, %s224
      %s226 = smul.addr %s225, 8
      %s227 = scalar_lea.vmem %s0, %s226
      %p228 = pneg %p52
      %p229 = pneg %p49
      %p230 = pneg %p73
      %p231 = pneg %p70
      %p232 = pneg %p94
      %p233 = pneg %p91
      %p234 = pneg %p115
      %p235 = pneg %p112
      %p236 = pneg %p143
      %p237 = pneg %p140
      %s238 = smul.u32 2, %s21
      %p239 = scmp.lt.s32.totalorder %s22, 1
      %s240 = scalar_select %p239, %s22, 1
      %p241 = scmp.lt.s32.totalorder %s238, 1
      %s242 = scalar_select %p241, %s238, 1
      %s243 = smul.addr %s240, 4
      %s244 = sadd.s32 %s242, %s243
      %s245 = smul.addr %s244, 8
      %s246 = scalar_lea.vmem %s4, %s245
      %p247 = pneg %p171
      %p248 = pneg %p168
      %s249 = smul.u32 2, %s21
      %p250 = scmp.lt.s32.totalorder %s22, 1
      %s251 = scalar_select %p250, %s22, 1
      %p252 = scmp.lt.s32.totalorder %s249, 1
      %s253 = scalar_select %p252, %s249, 1
      %s254 = smul.addr %s251, 6
      %s255 = sadd.s32 %s253, %s254
      %s256 = smul.addr %s255, 8
      %s257 = scalar_lea.vmem %s5, %s256
      %s258 = smul.u32 2, %s21
      %p259 = scmp.lt.s32.totalorder %s22, 1
      %s260 = scalar_select %p259, %s22, 1
      %p261 = scmp.lt.s32.totalorder %s258, 1
      %s262 = scalar_select %p261, %s258, 1
      %s263 = smul.addr %s260, 2
      %s264 = sadd.s32 %s262, %s263
      %s265 = smul.addr %s264, 8
      %s266 = scalar_lea.vmem %s0, %s265
      %s267 = smul.u32 2, %s21
      %s268 = smul.u32 2, %s21
      %p269 = scmp.lt.s32.totalorder %s22, 1
      %s270 = scalar_select %p269, %s22, 1
      %p271 = scmp.lt.s32.totalorder %s268, 1
      %s272 = scalar_select %p271, %s268, 1
      %s273 = smul.addr %s270, 4
      %s274 = sadd.s32 %s272, %s273
      %s275 = smul.addr %s274, 8
      %s276 = scalar_lea.vmem %s4, %s275
      %s277 = smul.u32 2, %s21
      %s278 = smul.u32 2, %s21
      %p279 = scmp.lt.s32.totalorder %s22, 1
      %s280 = scalar_select %p279, %s22, 1
      %p281 = scmp.lt.s32.totalorder %s278, 1
      %s282 = scalar_select %p281, %s278, 1
      %s283 = smul.addr %s280, 6
      %s284 = sadd.s32 %s282, %s283
      %s285 = smul.addr %s284, 8
      %s286 = scalar_lea.vmem %s5, %s285
      %s287 = smul.u32 2, %s21
      %v288 = vld [vmem:[%s266] sm:$0xff]
      %v289 = vld [vmem:[%s266 + $0x8] sm:$0xff]
      %v290 = vld [vmem:[%s1] sm:$0xff]
      %v291 = vld [vmem:[%s1 + $0x8] sm:$0xff]
      %v292 = vld [vmem:[%s1 + $0x10] sm:$0xff]
      %v293 = vld [vmem:[%s1 + $0x18] sm:$0xff]
      %v294 = vld [vmem:[%s1 + $0x20] sm:$0xff]
      %v295 = vld [vmem:[%s1 + $0x28] sm:$0xff]
      %v296 = vld [vmem:[%s1 + $0x30] sm:$0xff]
      %v297 = vld [vmem:[%s1 + $0x38] sm:$0xff]
      %v298 = vld [vmem:[%s2] sm:$0xff]
      %v299 = vld [vmem:[%s2 + $0x8] sm:$0xff]
      %v300 = vld [vmem:[%s2 + $0x10] sm:$0xff]
      %v301 = vld [vmem:[%s2 + $0x18] sm:$0xff]
      %v302 = vld [vmem:[%s2 + $0x20] sm:$0xff]
      %v303 = vld [vmem:[%s2 + $0x28] sm:$0xff]
      %v304 = vld [vmem:[%s2 + $0x30] sm:$0xff]
      %v305 = vld [vmem:[%s2 + $0x38] sm:$0xff]
      %307 = vset.pattern.permute.xlu0 0
      %308 = vperm.xlu0 %307, %v298
      %v309 = vpop.permute.xlu0 %308
      %312 = vset.pattern.permute.xlu0 0
      %313 = vperm.xlu0 %312, %v299
      %v314 = vpop.permute.xlu0 %313
      %317 = vset.pattern.permute.xlu0 0
      %318 = vperm.xlu0 %317, %v300
      %v319 = vpop.permute.xlu0 %318
      %322 = vset.pattern.permute.xlu0 0
      %323 = vperm.xlu0 %322, %v301
      %v324 = vpop.permute.xlu0 %323
      %327 = vset.pattern.permute.xlu0 0
      %328 = vperm.xlu0 %327, %v302
      %v329 = vpop.permute.xlu0 %328
      %332 = vset.pattern.permute.xlu0 0
      %333 = vperm.xlu0 %332, %v303
      %v334 = vpop.permute.xlu0 %333
      %337 = vset.pattern.permute.xlu0 0
      %338 = vperm.xlu0 %337, %v304
      %v339 = vpop.permute.xlu0 %338
      %342 = vset.pattern.permute.xlu0 0
      %343 = vperm.xlu0 %342, %v305
      %v344 = vpop.permute.xlu0 %343
      %vm346 = vcmask 64512
      %v348 = vsel %vm346, %v290, 0
      %v351 = vsel %vm346, %v291, 0
      %v354 = vsel %vm346, %v292, 0
      %v357 = vsel %vm346, %v293, 0
      %v360 = vsel %vm346, %v294, 0
      %v363 = vsel %vm346, %v295, 0
      %v366 = vsel %vm346, %v296, 0
      %v369 = vsel %vm346, %v297, 0
      %371 = vmatprep.subr.mxu0 0.0
      %372 = vmatpush1.msra.mxu0 0.0
      %373 = vmatprep.subr.mxu0 0.0
      %374 = vmatpush1.msra.mxu0 0.0
      %375 = vmatprep.subr.mxu0 0.0
      %376 = vmatpush1.msra.mxu0 0.0
      %377 = vmatprep.subr.mxu0 0.0
      %378 = vmatpush1.msra.mxu0 0.0
      %379 = vmatprep.subr.mxu0 0.0
      %380 = vmatpush1.msra.mxu0 0.0
      %381 = vmatprep.subr.mxu0 0.0
      %382 = vmatpush1.msra.mxu0 0.0
      %383 = vmatprep.subr.mxu0 0.0
      %384 = vmatpush1.msra.mxu0 0.0
      %385 = vmatprep.subr.mxu0 0.0
      %386 = vmatpush1.msra.mxu0 0.0
      %387 = vmatprep.subr.mxu0 0.0
      %388 = vmatpush1.msra.mxu0 0.0
      %389 = vmatprep.subr.mxu0 0.0
      %390 = vmatpush1.msra.mxu0 0.0
      %391 = vmatprep.subr.mxu0 0.0
      %392 = vmatpush1.msra.mxu0 0.0
      %393 = vmatprep.subr.mxu0 0.0
      %394 = vmatpush1.msra.mxu0 0.0
      %395 = vmatprep.subr.mxu0 0.0
      %396 = vmatpush1.msra.mxu0 0.0
      %397 = vmatprep.subr.mxu0 0.0
      %398 = vmatpush1.msra.mxu0 0.0
      %399 = vmatprep.subr.mxu0 0.0
      %400 = vmatpush1.msra.mxu0 0.0
      %401 = vmatprep.subr.mxu0 %v289
      %402 = vmatpush1.msra.mxu0 %v288
      %403 = vmatprep.subr.mxu0 0.0
      %404 = vmatpush2.msra.mxu0 0.0
      %405 = vmatprep.subr.mxu0 0.0
      %406 = vmatpush2.msra.mxu0 0.0
      %407 = vmatprep.subr.mxu0 0.0
      %408 = vmatpush2.msra.mxu0 0.0
      %409 = vmatprep.subr.mxu0 0.0
      %410 = vmatpush2.msra.mxu0 0.0
      %411 = vmatprep.subr.mxu0 0.0
      %412 = vmatpush2.msra.mxu0 0.0
      %413 = vmatprep.subr.mxu0 0.0
      %414 = vmatpush2.msra.mxu0 0.0
      %415 = vmatprep.subr.mxu0 0.0
      %416 = vmatpush2.msra.mxu0 0.0
      %417 = vmatprep.subr.mxu0 0.0
      %418 = vmatpush2.msra.mxu0 0.0
      %419 = vmatprep.subr.mxu0 0.0
      %420 = vmatpush2.msra.mxu0 0.0
      %421 = vmatprep.subr.mxu0 0.0
      %422 = vmatpush2.msra.mxu0 0.0
      %423 = vmatprep.subr.mxu0 0.0
      %424 = vmatpush2.msra.mxu0 0.0
      %425 = vmatprep.subr.mxu0 0.0
      %426 = vmatpush2.msra.mxu0 0.0
      %427 = vmatprep.subr.mxu0 0.0
      %428 = vmatpush2.msra.mxu0 0.0
      %429 = vmatprep.subr.mxu0 0.0
      %430 = vmatpush2.msra.mxu0 0.0
      %431 = vmatprep.subr.mxu0 0.0
      %432 = vmatpush2.msra.mxu0 0.0
      %433 = vmatprep.subr.mxu0 0.0
      %434 = vmatpush2.msra.mxu0 0.0
      %435 = vmatprep.mubr.f32.mxu0 0.0
      %436 = vmatmul.mubr.f32.gmra.mxu0 %v348
      %v437 = vpop.f32.mrf.mxu0
      %v438 = vadd.f32 %v309, %v437
      %v439 = vpop.f32.mrf.mxu0
      %v440 = vadd.f32 %v309, %v439
      %441 = vmatprep.mubr.f32.mxu0 0.0
      %442 = vmatmul.mubr.f32.gmra.mxu0 %v351
      %v443 = vpop.f32.mrf.mxu0
      %v444 = vadd.f32 %v314, %v443
      %v445 = vpop.f32.mrf.mxu0
      %v446 = vadd.f32 %v314, %v445
      %447 = vmatprep.mubr.f32.mxu0 0.0
      %448 = vmatmul.mubr.f32.gmra.mxu0 %v354
      %v449 = vpop.f32.mrf.mxu0
      %v450 = vadd.f32 %v319, %v449
      %v451 = vpop.f32.mrf.mxu0
      %v452 = vadd.f32 %v319, %v451
      %453 = vmatprep.mubr.f32.mxu0 0.0
      %454 = vmatmul.mubr.f32.gmra.mxu0 %v357
      %v455 = vpop.f32.mrf.mxu0
      %v456 = vadd.f32 %v324, %v455
      %v457 = vpop.f32.mrf.mxu0
      %v458 = vadd.f32 %v324, %v457
      %459 = vmatprep.mubr.f32.mxu0 0.0
      %460 = vmatmul.mubr.f32.gmra.mxu0 %v360
      %v461 = vpop.f32.mrf.mxu0
      %v462 = vadd.f32 %v329, %v461
      %v463 = vpop.f32.mrf.mxu0
      %v464 = vadd.f32 %v329, %v463
      %465 = vmatprep.mubr.f32.mxu0 0.0
      %466 = vmatmul.mubr.f32.gmra.mxu0 %v363
      %v467 = vpop.f32.mrf.mxu0
      %v468 = vadd.f32 %v334, %v467
      %v469 = vpop.f32.mrf.mxu0
      %v470 = vadd.f32 %v334, %v469
      %471 = vmatprep.mubr.f32.mxu0 0.0
      %472 = vmatmul.mubr.f32.gmra.mxu0 %v366
      %v473 = vpop.f32.mrf.mxu0
      %v474 = vadd.f32 %v339, %v473
      %v475 = vpop.f32.mrf.mxu0
      %v476 = vadd.f32 %v339, %v475
      %477 = vmatprep.mubr.f32.mxu0 0.0
      %478 = vmatmul.mubr.f32.gmra.mxu0 %v369
      %v479 = vpop.f32.mrf.mxu0
      %v480 = vadd.f32 %v344, %v479
      %v481 = vpop.f32.mrf.mxu0
      %v482 = vadd.f32 %v344, %v481
      %483 = vdwg.mxu0
      %s484 = smul.u32 %s21, 256
      %s485 = scvt.s32.f32 %s484
      %v486 = vlaneseq
      %v487 = vand.u32 %v486, 127
      %v488 = vadd.s32 %v487, 128
      %v489 = vcvt.s32.f32 %v487
      %v490 = vcvt.s32.f32 %v488
      %v491 = vstv %s485
      %v492 = vadd.f32 %v489, %v491
      %v493 = vadd.f32 %v490, %v491
      %v494 = vadd.f32 %v492, 0.5
      %v495 = vadd.f32 %v493, 0.5
      %v496 = vrcp.pop 16.0
      %v497 = vmul.f32 %v494, %v496
      %v498 = vmul.f32 %v495, %v496
      %v499 = vfloor.f32 %v497
      %v500 = vfloor.f32 %v498
      %v501 = vmul.f32 %v499, 16.0
      %v502 = vmul.f32 %v500, 16.0
      %v503 = vsub.f32 %v492, %v501
      %v504 = vsub.f32 %v493, %v502
      %v505 = vlaneseq
      %v506 = vshrl.u32 %v505, 7
      %v507 = vadd.s32 %v506, 8
      %vm508 = vcmp.lt.s32.totalorder %v506, 3
      %vm509 = vcmp.lt.s32.totalorder %v507, 3
      %vm510 = vcmp.ge.s32.totalorder %v506, 6
      %vm511 = vcmp.ge.s32.totalorder %v507, 6
      %vm512 = vcmp.lt.s32.totalorder %v506, 9
      %vm513 = vcmp.lt.s32.totalorder %v507, 9
      %vm514 = vmand %vm510, %vm512
      %vm515 = vmand %vm511, %vm513
      %vm516 = vmor %vm508, %vm514
      %vm517 = vmor %vm509, %vm515
      %v518 = vsel %vm516, 1, 0
      %v519 = vsel %vm517, 1, 0
      %vm520 = vcmp.eq.s32.totalorder %v518, 1
      %vm521 = vcmp.eq.s32.totalorder %v519, 1
      %v522 = vsel %vm520, %v503, %v499
      %v523 = vsel %vm520, %v504, %v500
      %v524 = vsel %vm521, %v503, %v499
      %v525 = vsel %vm521, %v504, %v500
      %vm526 = vcmp.lt.s32.totalorder %v506, 6
      %vm527 = vcmp.lt.s32.totalorder %v507, 6
      %v528 = vsel %vm526, -1.0, 1.0
      %v529 = vsel %vm527, -1.0, 1.0
      %v530 = vsub.f32 0.0, %v438
      %v531 = vsub.f32 0.0, %v440
      %v532 = vsub.f32 0.0, %v444
      %v533 = vsub.f32 0.0, %v446
      %v534 = vmul.f32 %v530, 1.442695
      %v535 = vpow.pop %v534
      %v536 = vmul.f32 %v531, 1.442695
      %v537 = vpow.pop %v536
      %v538 = vmul.f32 %v532, 1.442695
      %v539 = vpow.pop %v538
      %v540 = vmul.f32 %v533, 1.442695
      %v541 = vpow.pop %v540
      %v542 = vadd.f32 %v535, 1.0
      %v543 = vadd.f32 %v537, 1.0
      %v544 = vadd.f32 %v539, 1.0
      %v545 = vadd.f32 %v541, 1.0
      %v546 = vrcp.pop %v542
      %v547 = vrcp.pop %v543
      %v548 = vrcp.pop %v544
      %v549 = vrcp.pop %v545
      %v550 = vadd.f32 %v546, %v522
      %v551 = vadd.f32 %v547, %v523
      %v552 = vadd.f32 %v548, %v524
      %v553 = vadd.f32 %v549, %v525
      %v554 = vmul.f32 %v550, 32.0
      %v555 = vmul.f32 %v551, 32.0
      %v556 = vmul.f32 %v552, 32.0
      %v557 = vmul.f32 %v553, 32.0
      %v558 = vmul.f32 %v450, 1.442695
      %v559 = vpow.pop %v558
      %v560 = vmul.f32 %v452, 1.442695
      %v561 = vpow.pop %v560
      %v562 = vmul.f32 %v456, 1.442695
      %v563 = vpow.pop %v562
      %v564 = vmul.f32 %v458, 1.442695
      %v565 = vpow.pop %v564
      %v566 = vld [vmem:[%s3] sm:$0xff]
      %v567 = vld [vmem:[%s3 + $0x8] sm:$0xff]
      %569 = vset.pattern.permute.xlu0 0
      %570 = vperm.xlu0 %569, %v566
      %v571 = vpop.permute.xlu0 %570
      %574 = vset.pattern.permute.xlu0 0
      %575 = vperm.xlu0 %574, %v567
      %v576 = vpop.permute.xlu0 %575
      %v578 = vmul.f32 %v559, %v571
      %v579 = vmul.f32 %v561, %v571
      %v580 = vmul.f32 %v563, %v576
      %v581 = vmul.f32 %v565, %v576
      %v582 = vmul.f32 %v528, %v578
      %v583 = vmul.f32 %v528, %v579
      %v584 = vmul.f32 %v529, %v580
      %v585 = vmul.f32 %v529, %v581
      %v586 = vadd.f32 %v554, %v582
      %v587 = vadd.f32 %v555, %v583
      %v588 = vadd.f32 %v556, %v584
      %v589 = vadd.f32 %v557, %v585
      %590 = vst [vmem:[%s276] sm:$0xff] %v586
      %591 = vst [vmem:[%s276 + $0x8] sm:$0xff] %v587
      %592 = vst [vmem:[%s276 + $0x10] sm:$0xf] %v588
      %593 = vst [vmem:[%s276 + $0x18] sm:$0xf] %v589
      %v594 = vsub.f32 0.0, %v462
      %v595 = vsub.f32 0.0, %v464
      %v596 = vmul.f32 %v594, 1.442695
      %v597 = vpow.pop %v596
      %v598 = vmul.f32 %v595, 1.442695
      %v599 = vpow.pop %v598
      %v600 = vadd.f32 %v597, 1.0
      %v601 = vadd.f32 %v599, 1.0
      %v602 = vrcp.pop %v600
      %v603 = vrcp.pop %v601
      %v604 = vsub.f32 0.0, %v468
      %v605 = vsub.f32 0.0, %v470
      %v606 = vsub.f32 0.0, %v474
      %v607 = vsub.f32 0.0, %v476
      %v608 = vsub.f32 0.0, %v480
      %v609 = vsub.f32 0.0, %v482
      %v610 = vmul.f32 %v604, 1.442695
      %v611 = vpow.pop %v610
      %v612 = vmul.f32 %v605, 1.442695
      %v613 = vpow.pop %v612
      %v614 = vmul.f32 %v606, 1.442695
      %v615 = vpow.pop %v614
      %v616 = vmul.f32 %v607, 1.442695
      %v617 = vpow.pop %v616
      %v618 = vmul.f32 %v608, 1.442695
      %v619 = vpow.pop %v618
      %v620 = vmul.f32 %v609, 1.442695
      %v621 = vpow.pop %v620
      %v622 = vadd.f32 %v611, 1.0
      %v623 = vadd.f32 %v613, 1.0
      %v624 = vadd.f32 %v615, 1.0
      %v625 = vadd.f32 %v617, 1.0
      %v626 = vadd.f32 %v619, 1.0
      %v627 = vadd.f32 %v621, 1.0
      %v628 = vrcp.pop %v622
      %v629 = vrcp.pop %v623
      %v630 = vrcp.pop %v624
      %v631 = vrcp.pop %v625
      %v632 = vrcp.pop %v626
      %v633 = vrcp.pop %v627
      %v636 = vcombine.low %v602, %v603
      %v638 = vunpack.c.l.s4 1966171168
      %v639 = vunpack.c.0.s8 %v638
      %v640 = vlaneseq
      %v641 = vshrl.u32 %v640, 7
      %v642 = vsub.s32 %v639, %v641
      %v643 = vrot.slane %v636, %v642
      %v644 = vcombine.high %v643, %v643
      %v646 = vunpack.c.l.s4 1966171168
      %v647 = vunpack.c.0.s8 %v646
      %v648 = vlaneseq
      %v649 = vshrl.u32 %v648, 7
      %v650 = vsub.s32 %v647, %v649
      %v651 = vrot.slane %v643, %v650
      %v653 = vunpack.c.l.s4 1966171168
      %v654 = vunpack.c.0.s8 %v653
      %v655 = vlaneseq
      %v656 = vshrl.u32 %v655, 7
      %v657 = vsub.s32 %v654, %v656
      %v658 = vrot.slane %v644, %v657
      %v659 = vcombine.high %v651, %v651
      %v660 = vcombine.low %v651, %v658
      %v661 = vcombine.low %v659, %v651
      %v662 = vcombine.low %v658, %v659
      %v664 = vunpack.c.l.s4 1966171168
      %v665 = vunpack.c.0.s8 %v664
      %v666 = vlaneseq
      %v667 = vshrl.u32 %v666, 7
      %v668 = vsub.s32 %v665, %v667
      %v669 = vrot.slane %v660, %v668
      %v671 = vunpack.c.l.s4 1966171168
      %v672 = vunpack.c.0.s8 %v671
      %v673 = vlaneseq
      %v674 = vshrl.u32 %v673, 7
      %v675 = vsub.s32 %v672, %v674
      %v676 = vrot.slane %v661, %v675
      %v678 = vunpack.c.l.s4 1966171168
      %v679 = vunpack.c.0.s8 %v678
      %v680 = vlaneseq
      %v681 = vshrl.u32 %v680, 7
      %v682 = vsub.s32 %v679, %v681
      %v683 = vrot.slane %v662, %v682
      %v684 = vcombine.low %v669, %v676
      %v685 = vcombine.high %v669, %v676
      %v686 = vcombine.low %v683, %v669
      %v687 = vcombine.high %v683, %v669
      %v689 = vunpack.c.l.s4 1966171168
      %v690 = vunpack.c.0.s8 %v689
      %v691 = vlaneseq
      %v692 = vshrl.u32 %v691, 7
      %v693 = vsub.s32 %v690, %v692
      %v694 = vrot.slane %v684, %v693
      %v696 = vunpack.c.l.s4 1966171168
      %v697 = vunpack.c.0.s8 %v696
      %v698 = vlaneseq
      %v699 = vshrl.u32 %v698, 7
      %v700 = vsub.s32 %v697, %v699
      %v701 = vrot.slane %v685, %v700
      %v703 = vunpack.c.l.s4 1966171168
      %v704 = vunpack.c.0.s8 %v703
      %v705 = vlaneseq
      %v706 = vshrl.u32 %v705, 7
      %v707 = vsub.s32 %v704, %v706
      %v708 = vrot.slane %v686, %v707
      %v710 = vunpack.c.l.s4 1966171168
      %v711 = vunpack.c.0.s8 %v710
      %v712 = vlaneseq
      %v713 = vshrl.u32 %v712, 7
      %v714 = vsub.s32 %v711, %v713
      %v715 = vrot.slane %v687, %v714
      %v716 = vcombine.low %v694, %v708
      %v717 = vcombine.low %v701, %v715
      %v718 = vcombine.low %v676, %v683
      %v719 = vcombine.high %v676, %v683
      %v721 = vunpack.c.l.s4 1966171168
      %v722 = vunpack.c.0.s8 %v721
      %v723 = vlaneseq
      %v724 = vshrl.u32 %v723, 7
      %v725 = vsub.s32 %v722, %v724
      %v726 = vrot.slane %v718, %v725
      %v728 = vunpack.c.l.s4 1966171168
      %v729 = vunpack.c.0.s8 %v728
      %v730 = vlaneseq
      %v731 = vshrl.u32 %v730, 7
      %v732 = vsub.s32 %v729, %v731
      %v733 = vrot.slane %v719, %v732
      %v734 = vcombine.low %v726, %v694
      %v735 = vcombine.low %v733, %v701
      %v736 = vcombine.high %v683, %v683
      %v738 = vunpack.c.l.s4 1966171168
      %v739 = vunpack.c.0.s8 %v738
      %v740 = vlaneseq
      %v741 = vshrl.u32 %v740, 7
      %v742 = vsub.s32 %v739, %v741
      %v743 = vrot.slane %v683, %v742
      %v745 = vunpack.c.l.s4 1966171168
      %v746 = vunpack.c.0.s8 %v745
      %v747 = vlaneseq
      %v748 = vshrl.u32 %v747, 7
      %v749 = vsub.s32 %v746, %v748
      %v750 = vrot.slane %v736, %v749
      %v757 = vmul.f32 %v628, %v716
      %v758 = vmul.f32 %v629, %v717
      %v759 = vmul.f32 %v630, %v734
      %v760 = vmul.f32 %v631, %v735
      %v761 = vmul.f32 %v632, %v743
      %v762 = vmul.f32 %v633, %v750
      %763 = vst [vmem:[%s286] sm:$0xff] %v757
      %764 = vst [vmem:[%s286 + $0x8] sm:$0xff] %v758
      %765 = vst [vmem:[%s286 + $0x10] sm:$0xff] %v759
      %766 = vst [vmem:[%s286 + $0x18] sm:$0xff] %v760
      %767 = vst [vmem:[%s286 + $0x20] sm:$0x3] %v761
      %768 = vst [vmem:[%s286 + $0x28] sm:$0x3] %v762
      %s769 = smul.u32 2, %s21
      %p770 = scmp.lt.s32.totalorder %s22, 1
      %s771 = scalar_select %p770, %s22, 1
      %p772 = scmp.lt.s32.totalorder %s769, 1
      %s773 = scalar_select %p772, %s769, 1
      %s774 = smul.addr %s771, 4
      %s775 = sadd.s32 %s773, %s774
      %s776 = smul.addr %s775, 8
      %s777 = scalar_lea.vmem %s4, %s776
      %s778 = smul.u32 2, %s21
      %p779 = scmp.lt.s32.totalorder %s22, 1
      %s780 = scalar_select %p779, %s22, 1
      %p781 = scmp.lt.s32.totalorder %s778, 1
      %s782 = scalar_select %p781, %s778, 1
      %s783 = smul.addr %s780, 6
      %s784 = sadd.s32 %s782, %s783
      %s785 = smul.addr %s784, 8
      %s786 = scalar_lea.vmem %s5, %s785
      // Predicated region
      $region37: #{tpu_custom_call.1} parent=35 // pred_check
        %p787 = pneg %p140
      $region38: #{tpu_custom_call.1} parent=35 // pred_check_branch
        %789 = sbr.rel (%p787) target = $region40
      $region39: #{tpu_custom_call.1} parent=35 // pred_region
        %s790 = smul.u32 2, %s21
      $region40: #{tpu_custom_call.1} parent=35 // pred_fallthru
        _
      // Predicated region
      $region41: #{tpu_custom_call.1} parent=35 // pred_check
        %p791 = pneg %p168
      $region42: #{tpu_custom_call.1} parent=35 // pred_check_branch
        %793 = sbr.rel (%p791) target = $region44
      $region43: #{tpu_custom_call.1} parent=35 // pred_region
        %s794 = smul.u32 2, %s21
      $region44: #{tpu_custom_call.1} parent=35 // pred_fallthru
        _
    $region36: #{tpu_custom_call.1} parent=5 // pred_fallthru
      _
    %p795 = scmp.le.s32.totalorder 2, %s12
    // Predicated region
    $region45: #{tpu_custom_call.1} parent=5 // pred_check
      %p796 = pneg %p795
    $region46: #{tpu_custom_call.1} parent=5 // pred_check_branch
      %798 = sbr.rel (%p796) target = $region48
    $region47: #{tpu_custom_call.1} parent=5 // pred_region
      %s799 = ssub.s32 %s12, 2
      // Predicated region
      $region49: #{tpu_custom_call.1} parent=47 // pred_check
        %p800 = pneg %p146
      $region50: #{tpu_custom_call.1} parent=47 // pred_check_branch
        %802 = sbr.rel (%p800) target = $region52
      $region51: #{tpu_custom_call.1} parent=47 // pred_region
        %s803 = smul.u32 2, %s23
        %p804 = scmp.lt.s32.totalorder %s24, 1
        %s805 = scalar_select %p804, %s24, 1
        %p806 = scmp.lt.s32.totalorder %s803, 1
        %s807 = scalar_select %p806, %s803, 1
        %s808 = smul.addr %s805, 4
        %s809 = sadd.s32 %s807, %s808
        %s810 = smul.addr %s809, 8
        %s811 = scalar_lea.vmem %s4, %s810
      $region52: #{tpu_custom_call.1} parent=47 // pred_fallthru
        _
      // Predicated region
      $region53: #{tpu_custom_call.1} parent=47 // pred_check
        %p812 = pneg %p174
      $region54: #{tpu_custom_call.1} parent=47 // pred_check_branch
        %814 = sbr.rel (%p812) target = $region56
      $region55: #{tpu_custom_call.1} parent=47 // pred_region
        %s815 = smul.u32 2, %s23
        %p816 = scmp.lt.s32.totalorder %s24, 1
        %s817 = scalar_select %p816, %s24, 1
        %p818 = scmp.lt.s32.totalorder %s815, 1
        %s819 = scalar_select %p818, %s815, 1
        %s820 = smul.addr %s817, 6
        %s821 = sadd.s32 %s819, %s820
        %s822 = smul.addr %s821, 8
        %s823 = scalar_lea.vmem %s5, %s822
      $region56: #{tpu_custom_call.1} parent=47 // pred_fallthru
        _
    $region48: #{tpu_custom_call.1} parent=5 // pred_fallthru
      _
  $region6: #{tpu_custom_call.1} parent=0 // loop_footer
    %s16 = sadd.s32 1, %s12
  $region7: #{tpu_custom_call.1} parent=0 // loop_footer_branch
    %11 = sbr.rel target = $region3
  $region8: #{tpu_custom_call.1} parent=0 // loop_exit
    _

</llo_original>
